<compile_context>
chip_gen: v5e
topology: v5e:2x2
jax: 0.10.0
libtpu: 0.0.40
codegen_flags: <defaults>
</compile_context>

<pallas_src>
import functools

import jax
import jax.numpy as jnp
from jax import lax
from jax.experimental import pallas as pl
from jax.experimental.pallas import tpu as pltpu

EPS = 1e-5


def _round_up(n, m):
    return ((n + m - 1) // m) * m


def _conv_block_kernel(x_ref, p_ref, o_ref, *, L, Cin, Cf, w2_col, bn_col,
                       shortcut):
    """Whole residual block in one invocation (all operands resident in VMEM).

    x_ref : (N, Cin, L)  input in PyTorch NCL layout (re-layout done in-register)
    p_ref : (Cf, P)      packed params: [w1 | w2 | gamma1,beta1,gamma2,beta2],
                         each section starting at a lane-aligned column
    o_ref : (N, Cf, L)   output, NCL layout
    """
    N = x_ref.shape[0]
    NL = N * L

    # Channel-major slab (Cin, N*L): channels on sublanes, batch*length on
    # lanes. Built in-register from the NCL input that rode the DMA — no
    # wrapper-side HBM transpose.
    x = jnp.concatenate([x_ref[n] for n in range(N)], axis=1)

    # Lane position inside each length-L batch segment (conv padding=1 mask;
    # also kills the circular-roll wraparound and cross-batch leakage).
    lane = lax.broadcasted_iota(jnp.int32, (1, NL), 1)
    pos = (lane & (L - 1)) if (L & (L - 1)) == 0 else (lane % L)
    is_first = pos == 0
    is_last = pos == (L - 1)

    def im2col_bf16(a):
        # (C, NL) -> (3C, NL) rows [x[l-1]; x[l]; x[l+1]]. pltpu.roll runs on
        # the otherwise-idle XLU slot; shift must be non-negative so the "-1"
        # roll is a circular roll by NL-1. Mask math stays f32; result is cast
        # to bf16 for the MXU (halves the im2col vreg footprint too).
        tap_m1 = jnp.where(is_first, 0.0, pltpu.roll(a, shift=1, axis=1))
        tap_p1 = jnp.where(is_last, 0.0, pltpu.roll(a, shift=NL - 1, axis=1))
        return jnp.concatenate([tap_m1, a, tap_p1], axis=0).astype(jnp.bfloat16)

    def batchnorm(h, gamma, beta):
        # Training-mode batch statistics (biased variance), folded into one
        # FMA: out = h*scale + (beta - mean*scale). Single pass over the slab
        # (mean & E[h^2] together); no (Cf, NL) centered temporary.
        s1 = jnp.mean(h, axis=1, keepdims=True)
        s2 = jnp.mean(h * h, axis=1, keepdims=True)
        scale = gamma * lax.rsqrt(s2 - s1 * s1 + EPS)      # rsqrt -> EUP slot
        return h * scale + (beta - s1 * scale)

    # Packed parameter slab (single DMA): weights -> bf16 for the MXU,
    # BN params stay f32.
    w1 = p_ref[:, 0:3 * Cin].astype(jnp.bfloat16)                # (Cf, 3*Cin)
    w2 = p_ref[:, w2_col:w2_col + 3 * Cf].astype(jnp.bfloat16)   # (Cf, 3*Cf)
    bn = p_ref[:, bn_col:bn_col + 4]                             # (Cf, 4)

    # conv1 -> bn1 -> relu. Each conv is ONE MXU matmul: K=3 taps folded into
    # the contraction dim, batch folded into the columns. Conv biases are
    # dropped: exactly cancelled by bn's batch-mean subtraction.
    h = jnp.dot(w1, im2col_bf16(x), preferred_element_type=jnp.float32)
    h = jnp.maximum(batchnorm(h, bn[:, 0:1], bn[:, 1:2]), 0.0)

    # conv2 -> bn2
    o = jnp.dot(w2, im2col_bf16(h), preferred_element_type=jnp.float32)
    o = batchnorm(o, bn[:, 2:3], bn[:, 3:4])

    # Per-batch writeback in NCL layout (lane-aligned column slices when L is
    # a multiple of 128). The identity residual is re-read from VMEM here so
    # x's value is not kept live across both convs.
    for n in range(N):
        blk = o[:, n * L:(n + 1) * L]
        if shortcut:
            # TODO(synk): `downsample` is an arbitrary user-supplied nn.Module
            # and is not translated; only the identity shortcut is supported.
            blk = blk + x_ref[n]
        o_ref[n] = jnp.maximum(blk, 0.0).astype(o_ref.dtype)


def convolution_block(x, params, *, shortcut=False):
    """x: (N, Cin, L) float32 (PyTorch NCL layout). Returns (N, Cf, L)."""
    w1, b1, g1, be1, w2, b2, g2, be2 = params   # b1/b2 unused: cancelled by BN
    N, Cin, L = x.shape
    Cf, _, K = w1.shape
    assert K == 3, "kernel implements kernel_size=3, padding=1, stride=1"
    if shortcut:
        assert Cin == Cf, "identity shortcut requires input_dim == n_filters"

    # Pack ALL parameters into one (Cf, P) slab -> 2 input DMAs total (x + p).
    # Sections start at lane-aligned (multiple-of-128) columns.
    w1f = jnp.transpose(w1, (0, 2, 1)).reshape(Cf, K * Cin).astype(jnp.float32)
    w2f = jnp.transpose(w2, (0, 2, 1)).reshape(Cf, K * Cf).astype(jnp.float32)
    bnp = jnp.stack([g1, be1, g2, be2], axis=1).astype(jnp.float32)   # (Cf, 4)
    w2_col = _round_up(K * Cin, 128)
    bn_col = w2_col + _round_up(K * Cf, 128)

    def pad_to(a, width):
        return jnp.pad(a, ((0, 0), (0, width - a.shape[1])))

    pslab = jnp.concatenate(
        [pad_to(w1f, w2_col), pad_to(w2f, bn_col - w2_col), bnp], axis=1)

    # TODO(synk): at these tiny shapes a gridless single invocation is best
    # (latency-bound). When this block is used in a stack, fuse several blocks
    # into one pallas_call keeping the activation slab resident in VMEM. For
    # large L/channels, tile N*L with a 1-column halo + two-pass BN, mark that
    # axis dimension_semantics=("parallel",) (uses both v7x TensorCores), and
    # re-derive the tile size for v7x's 64 MiB VMEM.
    kernel = functools.partial(
        _conv_block_kernel, L=L, Cin=Cin, Cf=Cf,
        w2_col=w2_col, bn_col=bn_col, shortcut=shortcut)
    vmem = pl.BlockSpec(memory_space=pltpu.MemorySpace.VMEM)
    return pl.pallas_call(
        kernel,
        out_shape=jax.ShapeDtypeStruct((N, Cf, L), jnp.float32),
        in_specs=[vmem, vmem],
        out_specs=vmem,
    )(x.astype(jnp.float32), pslab)


# ----------------------------- pure-JAX reference -----------------------------
def _reference(x, params, *, shortcut=False):
    w1, b1, g1, be1, w2, b2, g2, be2 = params

    def conv1d(h, w, b):
        y = lax.conv_general_dilated(
            h, w, window_strides=(1,), padding=[(1, 1)],
            dimension_numbers=("NCH", "OIH", "NCH"))
        return y + b[None, :, None]

    def bn(h, g, be):
        m = jnp.mean(h, axis=(0, 2), keepdims=True)
        v = jnp.mean((h - m) ** 2, axis=(0, 2), keepdims=True)
        return g[None, :, None] * (h - m) * lax.rsqrt(v + EPS) + be[None, :, None]

    out = jnp.maximum(bn(conv1d(x, w1, b1), g1, be1), 0.0)
    out = bn(conv1d(out, w2, b2), g2, be2)
    if shortcut:
        out = out + x
    return jnp.maximum(out, 0.0)


if __name__ == "__main__":
    key = jax.random.PRNGKey(0)

    def make_params(k, cin, cf, ksz=3):
        ks = jax.random.split(k, 8)
        return (
            jax.random.normal(ks[0], (cf, cin, ksz), jnp.float32) * 0.1,  # conv1.w
            jax.random.normal(ks[1], (cf,), jnp.float32) * 0.1,           # conv1.b
            1.0 + 0.1 * jax.random.normal(ks[2], (cf,), jnp.float32),     # bn1.gamma
            0.1 * jax.random.normal(ks[3], (cf,), jnp.float32),           # bn1.beta
            jax.random.normal(ks[4], (cf, cf, ksz), jnp.float32) * 0.1,   # conv2.w
            jax.random.normal(ks[5], (cf,), jnp.float32) * 0.1,           # conv2.b
            1.0 + 0.1 * jax.random.normal(ks[6], (cf,), jnp.float32),     # bn2.gamma
            0.1 * jax.random.normal(ks[7], (cf,), jnp.float32),           # bn2.beta
        )

    # case 1: module default config (shortcut=False), input_dim != n_filters
    N, Cin, Cf, L = 2, 16, 32, 128
    k1, k2, k3, k4 = jax.random.split(key, 4)
    x = jax.random.normal(k1, (N, Cin, L), jnp.float32)
    params = make_params(k2, Cin, Cf)
    out = jax.block_until_ready(convolution_block(x, params, shortcut=False))
    ref = _reference(x, params, shortcut=False)
    assert out.shape == (N, Cf, L)
    assert jnp.allclose(out, ref, atol=5e-2, rtol=5e-2), float(
        jnp.max(jnp.abs(out - ref)))

    # case 2: identity residual path (shortcut=True, input_dim == n_filters)
    xs = jax.random.normal(k3, (N, Cf, L), jnp.float32)
    params_s = make_params(k4, Cf, Cf)
    out_s = jax.block_until_ready(convolution_block(xs, params_s, shortcut=True))
    ref_s = _reference(xs, params_s, shortcut=True)
    assert jnp.allclose(out_s, ref_s, atol=5e-2, rtol=5e-2), float(
        jnp.max(jnp.abs(out_s - ref_s)))

    print("KERNEL_OK")
</pallas_src>

<mosaic_0001>
module attributes {stable_mosaic.version = 11 : i64} {
  func.func @_conv_block_kernel(%arg0: memref<2x16x128xf32, #tpu.memory_space<vmem>>, %arg1: memref<32x260xf32, #tpu.memory_space<vmem>>, %arg2: memref<2x32x128xf32, #tpu.memory_space<vmem>>) attributes {dimension_semantics = [], scalar_prefetch = 0 : i64, scratch_operands = 0 : i64, tpu.core_type = #tpu.core_type<tc>} {
    %c0 = arith.constant 0 : index
    %c0_0 = arith.constant 0 : index
    %c0_1 = arith.constant 0 : index
    %0 = vector.load %arg0[%c0, %c0_0, %c0_1] : memref<2x16x128xf32, #tpu.memory_space<vmem>>, vector<1x16x128xf32>
    %1 = vector.shape_cast %0 : vector<1x16x128xf32> to vector<16x128xf32>
    %c1 = arith.constant 1 : index
    %c0_2 = arith.constant 0 : index
    %c0_3 = arith.constant 0 : index
    %2 = vector.load %arg0[%c1, %c0_2, %c0_3] : memref<2x16x128xf32, #tpu.memory_space<vmem>>, vector<1x16x128xf32>
    %3 = vector.shape_cast %2 : vector<1x16x128xf32> to vector<16x128xf32>
    %4 = tpu.concatenate %1, %3 in 1 : vector<16x128xf32>, vector<16x128xf32> -> vector<16x256xf32>
    %5 = tpu.iota {dimensions = array<i32: 1>} : vector<1x256xi32>
    %c127_i32 = arith.constant 127 : i32
    %6 = vector.broadcast %c127_i32 : i32 to vector<1x256xi32>
    %7 = arith.andi %5, %6 : vector<1x256xi32>
    %c0_i32 = arith.constant 0 : i32
    %8 = vector.broadcast %c0_i32 : i32 to vector<1x256xi32>
    %9 = arith.cmpi eq, %7, %8 : vector<1x256xi32>
    %c127_i32_4 = arith.constant 127 : i32
    %10 = vector.broadcast %c127_i32_4 : i32 to vector<1x256xi32>
    %11 = arith.cmpi eq, %7, %10 : vector<1x256xi32>
    %c0_5 = arith.constant 0 : index
    %c0_6 = arith.constant 0 : index
    %12 = vector.load %arg1[%c0_5, %c0_6] : memref<32x260xf32, #tpu.memory_space<vmem>>, vector<32x48xf32>
    %13 = arith.truncf %12 : vector<32x48xf32> to vector<32x48xbf16>
    %c0_7 = arith.constant 0 : index
    %c128 = arith.constant 128 : index
    %14 = vector.load %arg1[%c0_7, %c128] : memref<32x260xf32, #tpu.memory_space<vmem>>, vector<32x96xf32>
    %15 = arith.truncf %14 : vector<32x96xf32> to vector<32x96xbf16>
    %c0_8 = arith.constant 0 : index
    %c256 = arith.constant 256 : index
    %16 = vector.load %arg1[%c0_8, %c256] : memref<32x260xf32, #tpu.memory_space<vmem>>, vector<32x4xf32>
    %c1_i32 = arith.constant 1 : i32
    %17 = tpu.dynamic_rotate %4 by %c1_i32 dim 1 : vector<16x256xf32>, i32 -> vector<16x256xf32>
    %cst = arith.constant 0.000000e+00 : f32
    %18 = vector.shape_cast %9 : vector<1x256xi1> to vector<1x256xi1>
    %19 = vector.broadcast %18 : vector<1x256xi1> to vector<16x256xi1>
    %20 = vector.broadcast %cst : f32 to vector<16x256xf32>
    %21 = arith.select %19, %20, %17 : vector<16x256xi1>, vector<16x256xf32>
    %c255_i32 = arith.constant 255 : i32
    %22 = tpu.dynamic_rotate %4 by %c255_i32 dim 1 : vector<16x256xf32>, i32 -> vector<16x256xf32>
    %cst_9 = arith.constant 0.000000e+00 : f32
    %23 = vector.shape_cast %11 : vector<1x256xi1> to vector<1x256xi1>
    %24 = vector.broadcast %23 : vector<1x256xi1> to vector<16x256xi1>
    %25 = vector.broadcast %cst_9 : f32 to vector<16x256xf32>
    %26 = arith.select %24, %25, %22 : vector<16x256xi1>, vector<16x256xf32>
    %27 = tpu.concatenate %21, %4, %26 in 0 : vector<16x256xf32>, vector<16x256xf32>, vector<16x256xf32> -> vector<48x256xf32>
    %28 = arith.truncf %27 : vector<48x256xf32> to vector<48x256xbf16>
    %cst_10 = arith.constant dense<0.000000e+00> : vector<32x256xf32>
    %29 = tpu.matmul %13, %28, %cst_10 {dimension_numbers = #tpu.dot_dimension_numbers<[1], [0], [0], [1], [0, 0, 1, 1], [], []>} : vector<32x48xbf16>, vector<48x256xbf16>, vector<32x256xf32> -> vector<32x256xf32>
    %30 = vector.extract_strided_slice %16 {offsets = [0, 0], sizes = [32, 1], strides = [1, 1]} : vector<32x4xf32> to vector<32x1xf32>
    %31 = vector.extract_strided_slice %16 {offsets = [0, 1], sizes = [32, 1], strides = [1, 1]} : vector<32x4xf32> to vector<32x1xf32>
    %cst_11 = arith.constant dense<0.000000e+00> : vector<32xf32>
    %32 = vector.multi_reduction <add>, %29, %cst_11 [1] : vector<32x256xf32> to vector<32xf32>
    %33 = vector.shape_cast %32 : vector<32xf32> to vector<32x1xf32>
    %cst_12 = arith.constant 2.560000e+02 : f32
    %34 = vector.broadcast %cst_12 : f32 to vector<32x1xf32>
    %35 = arith.divf %33, %34 : vector<32x1xf32>
    %36 = arith.mulf %29, %29 : vector<32x256xf32>
    %cst_13 = arith.constant dense<0.000000e+00> : vector<32xf32>
    %37 = vector.multi_reduction <add>, %36, %cst_13 [1] : vector<32x256xf32> to vector<32xf32>
    %38 = vector.shape_cast %37 : vector<32xf32> to vector<32x1xf32>
    %cst_14 = arith.constant 2.560000e+02 : f32
    %39 = vector.broadcast %cst_14 : f32 to vector<32x1xf32>
    %40 = arith.divf %38, %39 : vector<32x1xf32>
    %41 = arith.mulf %35, %35 : vector<32x1xf32>
    %42 = arith.subf %40, %41 : vector<32x1xf32>
    %cst_15 = arith.constant 9.99999974E-6 : f32
    %43 = vector.broadcast %cst_15 : f32 to vector<32x1xf32>
    %44 = arith.addf %42, %43 : vector<32x1xf32>
    %45 = math.rsqrt %44 : vector<32x1xf32>
    %46 = arith.mulf %30, %45 : vector<32x1xf32>
    %47 = vector.broadcast %46 : vector<32x1xf32> to vector<32x256xf32>
    %48 = arith.mulf %29, %47 : vector<32x256xf32>
    %49 = arith.mulf %35, %46 : vector<32x1xf32>
    %50 = arith.subf %31, %49 : vector<32x1xf32>
    %51 = vector.broadcast %50 : vector<32x1xf32> to vector<32x256xf32>
    %52 = arith.addf %48, %51 : vector<32x256xf32>
    %cst_16 = arith.constant 0.000000e+00 : f32
    %53 = vector.broadcast %cst_16 : f32 to vector<32x256xf32>
    %54 = arith.maximumf %52, %53 : vector<32x256xf32>
    %c1_i32_17 = arith.constant 1 : i32
    %55 = tpu.dynamic_rotate %54 by %c1_i32_17 dim 1 : vector<32x256xf32>, i32 -> vector<32x256xf32>
    %cst_18 = arith.constant 0.000000e+00 : f32
    %56 = vector.shape_cast %9 : vector<1x256xi1> to vector<1x256xi1>
    %57 = vector.broadcast %56 : vector<1x256xi1> to vector<32x256xi1>
    %58 = vector.broadcast %cst_18 : f32 to vector<32x256xf32>
    %59 = arith.select %57, %58, %55 : vector<32x256xi1>, vector<32x256xf32>
    %c255_i32_19 = arith.constant 255 : i32
    %60 = tpu.dynamic_rotate %54 by %c255_i32_19 dim 1 : vector<32x256xf32>, i32 -> vector<32x256xf32>
    %cst_20 = arith.constant 0.000000e+00 : f32
    %61 = vector.shape_cast %11 : vector<1x256xi1> to vector<1x256xi1>
    %62 = vector.broadcast %61 : vector<1x256xi1> to vector<32x256xi1>
    %63 = vector.broadcast %cst_20 : f32 to vector<32x256xf32>
    %64 = arith.select %62, %63, %60 : vector<32x256xi1>, vector<32x256xf32>
    %65 = tpu.concatenate %59, %54, %64 in 0 : vector<32x256xf32>, vector<32x256xf32>, vector<32x256xf32> -> vector<96x256xf32>
    %66 = arith.truncf %65 : vector<96x256xf32> to vector<96x256xbf16>
    %cst_21 = arith.constant dense<0.000000e+00> : vector<32x256xf32>
    %67 = tpu.matmul %15, %66, %cst_21 {dimension_numbers = #tpu.dot_dimension_numbers<[1], [0], [0], [1], [0, 0, 1, 1], [], []>} : vector<32x96xbf16>, vector<96x256xbf16>, vector<32x256xf32> -> vector<32x256xf32>
    %68 = vector.extract_strided_slice %16 {offsets = [0, 2], sizes = [32, 1], strides = [1, 1]} : vector<32x4xf32> to vector<32x1xf32>
    %69 = vector.extract_strided_slice %16 {offsets = [0, 3], sizes = [32, 1], strides = [1, 1]} : vector<32x4xf32> to vector<32x1xf32>
    %cst_22 = arith.constant dense<0.000000e+00> : vector<32xf32>
    %70 = vector.multi_reduction <add>, %67, %cst_22 [1] : vector<32x256xf32> to vector<32xf32>
    %71 = vector.shape_cast %70 : vector<32xf32> to vector<32x1xf32>
    %cst_23 = arith.constant 2.560000e+02 : f32
    %72 = vector.broadcast %cst_23 : f32 to vector<32x1xf32>
    %73 = arith.divf %71, %72 : vector<32x1xf32>
    %74 = arith.mulf %67, %67 : vector<32x256xf32>
    %cst_24 = arith.constant dense<0.000000e+00> : vector<32xf32>
    %75 = vector.multi_reduction <add>, %74, %cst_24 [1] : vector<32x256xf32> to vector<32xf32>
    %76 = vector.shape_cast %75 : vector<32xf32> to vector<32x1xf32>
    %cst_25 = arith.constant 2.560000e+02 : f32
    %77 = vector.broadcast %cst_25 : f32 to vector<32x1xf32>
    %78 = arith.divf %76, %77 : vector<32x1xf32>
    %79 = arith.mulf %73, %73 : vector<32x1xf32>
    %80 = arith.subf %78, %79 : vector<32x1xf32>
    %cst_26 = arith.constant 9.99999974E-6 : f32
    %81 = vector.broadcast %cst_26 : f32 to vector<32x1xf32>
    %82 = arith.addf %80, %81 : vector<32x1xf32>
    %83 = math.rsqrt %82 : vector<32x1xf32>
    %84 = arith.mulf %68, %83 : vector<32x1xf32>
    %85 = vector.broadcast %84 : vector<32x1xf32> to vector<32x256xf32>
    %86 = arith.mulf %67, %85 : vector<32x256xf32>
    %87 = arith.mulf %73, %84 : vector<32x1xf32>
    %88 = arith.subf %69, %87 : vector<32x1xf32>
    %89 = vector.broadcast %88 : vector<32x1xf32> to vector<32x256xf32>
    %90 = arith.addf %86, %89 : vector<32x256xf32>
    %91 = vector.extract_strided_slice %90 {offsets = [0, 0], sizes = [32, 128], strides = [1, 1]} : vector<32x256xf32> to vector<32x128xf32>
    %cst_27 = arith.constant 0.000000e+00 : f32
    %92 = vector.broadcast %cst_27 : f32 to vector<32x128xf32>
    %93 = arith.maximumf %91, %92 : vector<32x128xf32>
    %c0_28 = arith.constant 0 : index
    %c0_29 = arith.constant 0 : index
    %c0_30 = arith.constant 0 : index
    %94 = vector.load %arg2[%c0_28, %c0_29, %c0_30] : memref<2x32x128xf32, #tpu.memory_space<vmem>>, vector<1x32x128xf32>
    %95 = vector.shape_cast %94 : vector<1x32x128xf32> to vector<32x128xf32>
    %96 = vector.shape_cast %93 : vector<32x128xf32> to vector<1x32x128xf32>
    tpu.vector_store %arg2[%c0_28, %c0_29, %c0_30], %96 {strides = array<i32>} : memref<2x32x128xf32, #tpu.memory_space<vmem>>, vector<1x32x128xf32>,
    %97 = vector.extract_strided_slice %90 {offsets = [0, 128], sizes = [32, 128], strides = [1, 1]} : vector<32x256xf32> to vector<32x128xf32>
    %cst_31 = arith.constant 0.000000e+00 : f32
    %98 = vector.broadcast %cst_31 : f32 to vector<32x128xf32>
    %99 = arith.maximumf %97, %98 : vector<32x128xf32>
    %c1_32 = arith.constant 1 : index
    %c0_33 = arith.constant 0 : index
    %c0_34 = arith.constant 0 : index
    %100 = vector.load %arg2[%c1_32, %c0_33, %c0_34] : memref<2x32x128xf32, #tpu.memory_space<vmem>>, vector<1x32x128xf32>
    %101 = vector.shape_cast %100 : vector<1x32x128xf32> to vector<32x128xf32>
    %102 = vector.shape_cast %99 : vector<32x128xf32> to vector<1x32x128xf32>
    tpu.vector_store %arg2[%c1_32, %c0_33, %c0_34], %102 {strides = array<i32>} : memref<2x32x128xf32, #tpu.memory_space<vmem>>, vector<1x32x128xf32>,
    return
  }
}

</mosaic_0001>

<llo_original>
// kernel: tpu_custom_call.1
$region0: #{tpu_custom_call.1}
  #allocation0 [shape = 'u32[]', space=smem, size = 0x4, offset = 0x4, fixed_abs, tag = 'smem constant byte address 0x4 - core index']
  #allocation1 [shape = 'u32[72,128]{1,0:T(1,128)}', space=vmem, size = 0x9000, scoped, tag = 'internal scratch']
  %s0 = inlined_call_operand.hbm [shape: f32[2,16,128], index: 0, kind: input, shape index: {}]
  %s1 = inlined_call_operand.hbm [shape: f32[32,260], index: 1, kind: input, shape index: {}]
  %s2 = inlined_call_operand.hbm [shape: f32[2,32,128], index: 2, kind: output, shape index: {}]
  %s3 = sld [smem:[#allocation0]]
  $region26: #{tpu_custom_call.1} parent=0
    _
  %s5 = ssub.s32 1, %s3
  %s6 = scalar_select 0, %s5, %s3
  $region1: #{tpu_custom_call.1} parent=0
    #allocation2 [shape = 'u8[16384]{0}', space=vmem, size = 0x4000, scoped, tag = 'input window, operand 0, single buffered']
    #allocation3 [shape = 's32[1]{0}', space=sflag, size = 0x4, scoped, tag = 'scoped memory for tpu_custom_call.1']
    #allocation4 [shape = 's32[1]{0}', space=sflag, size = 0x4, scoped, tag = 'scoped memory for tpu_custom_call.1']
    #allocation5 [shape = 'u8[49152]{0}', space=vmem, size = 0xc000, scoped, tag = 'input window, operand 1, single buffered']
    #allocation6 [shape = 's32[1]{0}', space=sflag, size = 0x4, scoped, tag = 'scoped memory for tpu_custom_call.1']
    #allocation7 [shape = 'u8[32768]{0}', space=vmem, size = 0x8000, scoped, tag = 'output window, operand 0, single buffered']
    %7 = vsyncpa [#allocation3], 0
    %8 = vsyncpa [#allocation6], 0
    %9 = vsyncpa [#allocation4], 0
    // Predicated region
    $region2: #{tpu_custom_call.1} parent=1 // pred_check
      _
    $region3: #{tpu_custom_call.1} parent=1 // pred_check_branch
      %11 = sbr.rel (0) target = $region5
    $region4: #{tpu_custom_call.1} parent=1 // pred_region
      %13 = vsyncadd [#allocation3], 0
      %s14 = sshll.u32 %s0, 4
      %s15 = int_to_ptr.hbm [resolvable:$true] %s14
      %s16 = sshll.u32 [#allocation2], 4
      %s17 = int_to_ptr.vmem [resolvable:$true] %s16
      %22 = dma.hbm_to_vmem [thread:$0]  %s15, 512, %s17, [#allocation3], 128, 128, 8
    $region5: #{tpu_custom_call.1} parent=1 // pred_fallthru
      _
    // Predicated region
    $region6: #{tpu_custom_call.1} parent=1 // pred_check
      _
    $region7: #{tpu_custom_call.1} parent=1 // pred_check_branch
      %24 = sbr.rel (0) target = $region9
    $region8: #{tpu_custom_call.1} parent=1 // pred_region
      %26 = vsyncadd [#allocation6], 0
      %s27 = sshll.u32 %s1, 4
      %s28 = int_to_ptr.hbm [resolvable:$true] %s27
      %s29 = sshll.u32 [#allocation5], 4
      %s30 = int_to_ptr.vmem [resolvable:$true] %s29
      %35 = dma.hbm_to_vmem [thread:$0]  %s28, 1536, %s30, [#allocation6], 384, 384, 24
    $region9: #{tpu_custom_call.1} parent=1 // pred_fallthru
      _
    // Predicated region
    $region10: #{tpu_custom_call.1} parent=1 // pred_check
      _
    $region11: #{tpu_custom_call.1} parent=1 // pred_check_branch
      %37 = sbr.rel (0) target = $region13
    $region12: #{tpu_custom_call.1} parent=1 // pred_region
      %39 = dma.done [#allocation3], 512
    $region13: #{tpu_custom_call.1} parent=1 // pred_fallthru
      _
    // Predicated region
    $region14: #{tpu_custom_call.1} parent=1 // pred_check
      _
    $region15: #{tpu_custom_call.1} parent=1 // pred_check_branch
      %41 = sbr.rel (0) target = $region17
    $region16: #{tpu_custom_call.1} parent=1 // pred_region
      %43 = dma.done [#allocation6], 1536
    $region17: #{tpu_custom_call.1} parent=1 // pred_fallthru
      _
    %v45 = vld [vmem:[#allocation2] sm:$0xff]
    %v46 = vld [vmem:[#allocation2 + $0x8] sm:$0xff]
    %s47 = scalar_lea.vmem [#allocation2], 16
    %v48 = vld [vmem:[%s47] sm:$0xff]
    %v49 = vld [vmem:[%s47 + $0x8] sm:$0xff]
    %v50 = vlaneseq
    %v51 = vand.u32 %v50, 127
    %v52 = vadd.s32 %v51, 128
    %v53 = vand.u32 %v51, 127
    %v54 = vand.u32 %v52, 127
    %vm55 = vcmp.eq.s32.totalorder %v53, 0
    %vm56 = vcmp.eq.s32.totalorder %v54, 0
    %vm57 = vcmp.eq.s32.totalorder %v53, 127
    %vm58 = vcmp.eq.s32.totalorder %v54, 127
    %v59 = vld [vmem:[#allocation5] sm:$0xff]
    %v60 = vld [vmem:[#allocation5 + $0x18] sm:$0xff]
    %v61 = vld [vmem:[#allocation5 + $0x30] sm:$0xff]
    %v62 = vld [vmem:[#allocation5 + $0x48] sm:$0xff]
    %v63 = vpack.c.bf16 %v60, %v59
    %v64 = vpack.c.bf16 %v62, %v61
    %v65 = vld [vmem:[#allocation5 + $0x8] sm:$0xff]
    %v66 = vld [vmem:[#allocation5 + $0x20] sm:$0xff]
    %v67 = vld [vmem:[#allocation5 + $0x38] sm:$0xff]
    %v68 = vld [vmem:[#allocation5 + $0x50] sm:$0xff]
    %v69 = vpack.c.bf16 %v66, %v65
    %v70 = vpack.c.bf16 %v68, %v67
    %v71 = vld [vmem:[#allocation5 + $0x10] sm:$0xff]
    %v72 = vld [vmem:[#allocation5 + $0x28] sm:$0xff]
    %v73 = vld [vmem:[#allocation5 + $0x40] sm:$0xff]
    %v74 = vld [vmem:[#allocation5 + $0x58] sm:$0xff]
    %75 = vrot.lane.b32.xlu0 %v45, 1
    %v76 = vpop.permute.xlu0 %75
    %77 = vrot.lane.b32.xlu0 %v46, 1
    %v78 = vpop.permute.xlu0 %77
    %79 = vrot.lane.b32.xlu0 %v48, 1
    %v80 = vpop.permute.xlu0 %79
    %81 = vrot.lane.b32.xlu0 %v49, 1
    %v82 = vpop.permute.xlu0 %81
    %vm83 = vcmp.lt.s32.totalorder %v51, 1
    %v84 = vsel %vm83, %v76, %v80
    %v85 = vsel %vm83, %v78, %v82
    %v86 = vsel %vm83, %v80, %v76
    %v87 = vsel %vm83, %v82, %v78
    %v88 = vsel %vm55, 1, 0
    %v89 = vsel %vm56, 1, 0
    %vm90 = vcmp.eq.s32.totalorder %v88, 1
    %vm91 = vcmp.eq.s32.totalorder %v89, 1
    %v92 = vsel %vm90, 0.0, %v86
    %v93 = vsel %vm91, 0.0, %v84
    %v94 = vsel %vm90, 0.0, %v87
    %v95 = vsel %vm91, 0.0, %v85
    %96 = vrot.lane.b32.xlu0 %v45, 127
    %v97 = vpop.permute.xlu0 %96
    %98 = vrot.lane.b32.xlu0 %v46, 127
    %v99 = vpop.permute.xlu0 %98
    %100 = vrot.lane.b32.xlu0 %v48, 127
    %v101 = vpop.permute.xlu0 %100
    %102 = vrot.lane.b32.xlu0 %v49, 127
    %v103 = vpop.permute.xlu0 %102
    %vm104 = vcmp.lt.s32.totalorder %v51, 127
    %v105 = vsel %vm104, %v97, %v101
    %v106 = vsel %vm104, %v99, %v103
    %v107 = vsel %vm104, %v101, %v97
    %v108 = vsel %vm104, %v103, %v99
    %v109 = vsel %vm57, 1, 0
    %v110 = vsel %vm58, 1, 0
    %vm111 = vcmp.eq.s32.totalorder %v109, 1
    %vm112 = vcmp.eq.s32.totalorder %v110, 1
    %v113 = vsel %vm111, 0.0, %v105
    %v114 = vsel %vm112, 0.0, %v107
    %v115 = vsel %vm111, 0.0, %v106
    %v116 = vsel %vm112, 0.0, %v108
    %v117 = vpack.c.bf16 %v94, %v92
    %v118 = vpack.c.bf16 %v95, %v93
    %v119 = vpack.c.bf16 %v46, %v45
    %v120 = vpack.c.bf16 %v49, %v48
    %v121 = vpack.c.bf16 %v115, %v113
    %v122 = vpack.c.bf16 %v116, %v114
    %vm123 = vcmask 392192
    %v125 = vsel %vm123, %v63, 0
    %v128 = vsel %vm123, %v64, 0
    %130 = vmatpush.bf16.msra.mxu0 0
    %131 = vmatpush.bf16.msra.mxu0 0
    %132 = vmatpush.bf16.msra.mxu0 0
    %133 = vmatpush.bf16.msra.mxu0 0
    %134 = vmatpush.bf16.msra.mxu0 0
    %135 = vmatpush.bf16.msra.mxu0 %v121
    %136 = vmatpush.bf16.msra.mxu0 %v119
    %137 = vmatpush.bf16.msra.mxu0 %v117
    %138 = vmatmul.bf16.gmra.mxu0 %v125
    %v139 = vpop.f32.mrf.mxu0
    %v140 = vadd.f32 0.0, %v139
    %v141 = vpop.f32.mrf.mxu0
    %v142 = vadd.f32 0.0, %v141
    %143 = vmatmul.bf16.gmra.mxu0 %v128
    %v144 = vpop.f32.mrf.mxu0
    %v145 = vadd.f32 0.0, %v144
    %v146 = vpop.f32.mrf.mxu0
    %v147 = vadd.f32 0.0, %v146
    %148 = vdwg.mxu0
    %149 = vmatpush.bf16.msra.mxu0 0
    %150 = vmatpush.bf16.msra.mxu0 0
    %151 = vmatpush.bf16.msra.mxu0 0
    %152 = vmatpush.bf16.msra.mxu0 0
    %153 = vmatpush.bf16.msra.mxu0 0
    %154 = vmatpush.bf16.msra.mxu0 %v122
    %155 = vmatpush.bf16.msra.mxu0 %v120
    %156 = vmatpush.bf16.msra.mxu0 %v118
    %157 = vmatmul.bf16.gmra.mxu0 %v125
    %v158 = vpop.f32.mrf.mxu0
    %v159 = vadd.f32 0.0, %v158
    %v160 = vpop.f32.mrf.mxu0
    %v161 = vadd.f32 0.0, %v160
    %162 = vmatmul.bf16.gmra.mxu0 %v128
    %v163 = vpop.f32.mrf.mxu0
    %v164 = vadd.f32 0.0, %v163
    %v165 = vpop.f32.mrf.mxu0
    %v166 = vadd.f32 0.0, %v165
    %167 = vdwg.mxu0
    %v168 = vadd.f32 %v140, %v159
    %169 = vadd.xlane.f32.xlu0 %v168
    %v170 = vpop.xlane.xlu0 %169
    %v171 = vadd.f32 %v142, %v161
    %172 = vadd.xlane.f32.xlu0 %v171
    %v173 = vpop.xlane.xlu0 %172
    %v174 = vadd.f32 %v145, %v164
    %175 = vadd.xlane.f32.xlu0 %v174
    %v176 = vpop.xlane.xlu0 %175
    %v177 = vadd.f32 %v147, %v166
    %178 = vadd.xlane.f32.xlu0 %v177
    %v179 = vpop.xlane.xlu0 %178
    %v180 = vrcp.pop 256.0
    %v181 = vmul.f32 256.0, %v180
    %v182 = vsub.f32 1.0, %v181
    %v183 = vmul.f32 %v180, %v182
    %v184 = vadd.f32 %v180, %v183
    %vm185 = vweird.f32 %v180
    %v186 = vsel %vm185, %v180, %v184
    %v187 = vmul.f32 %v170, %v186
    %v188 = vmul.f32 %v173, %v186
    %v189 = vmul.f32 %v176, %v186
    %v190 = vmul.f32 %v179, %v186
    %v191 = vmul.f32 %v140, %v140
    %v192 = vmul.f32 %v159, %v159
    %v193 = vmul.f32 %v142, %v142
    %v194 = vmul.f32 %v161, %v161
    %v195 = vmul.f32 %v145, %v145
    %v196 = vmul.f32 %v164, %v164
    %v197 = vmul.f32 %v147, %v147
    %v198 = vmul.f32 %v166, %v166
    %v199 = vadd.f32 %v191, %v192
    %200 = vadd.xlane.f32.xlu0 %v199
    %v201 = vpop.xlane.xlu0 %200
    %v202 = vadd.f32 %v193, %v194
    %203 = vadd.xlane.f32.xlu0 %v202
    %v204 = vpop.xlane.xlu0 %203
    %v205 = vadd.f32 %v195, %v196
    %206 = vadd.xlane.f32.xlu0 %v205
    %v207 = vpop.xlane.xlu0 %206
    %v208 = vadd.f32 %v197, %v198
    %209 = vadd.xlane.f32.xlu0 %v208
    %v210 = vpop.xlane.xlu0 %209
    %v211 = vmul.f32 %v201, %v186
    %v212 = vmul.f32 %v204, %v186
    %v213 = vmul.f32 %v207, %v186
    %v214 = vmul.f32 %v210, %v186
    %v215 = vmul.f32 %v187, %v187
    %v216 = vmul.f32 %v188, %v188
    %v217 = vmul.f32 %v189, %v189
    %v218 = vmul.f32 %v190, %v190
    %v219 = vsub.f32 %v211, %v215
    %v220 = vsub.f32 %v212, %v216
    %v221 = vsub.f32 %v213, %v217
    %v222 = vsub.f32 %v214, %v218
    %v223 = vadd.f32 %v219, 1e-05
    %v224 = vadd.f32 %v220, 1e-05
    %v225 = vadd.f32 %v221, 1e-05
    %v226 = vadd.f32 %v222, 1e-05
    %v227 = vrsqrt.pop %v223
    %v228 = vmul.f32 %v227, %v223
    %v229 = vmul.f32 %v228, %v227
    %v230 = vmul.f32 0.5, %v229
    %v231 = vsub.f32 1.5, %v230
    %v232 = vmul.f32 %v227, %v231
    %vm233 = vweird.f32 %v223
    %vm234 = vweird.f32 %v227
    %vm235 = vmor %vm233, %vm234
    %v236 = vsel %vm235, %v227, %v232
    %v237 = vrsqrt.pop %v224
    %v238 = vmul.f32 %v237, %v224
    %v239 = vmul.f32 %v238, %v237
    %v240 = vmul.f32 0.5, %v239
    %v241 = vsub.f32 1.5, %v240
    %v242 = vmul.f32 %v237, %v241
    %vm243 = vweird.f32 %v224
    %vm244 = vweird.f32 %v237
    %vm245 = vmor %vm243, %vm244
    %v246 = vsel %vm245, %v237, %v242
    %v247 = vrsqrt.pop %v225
    %v248 = vmul.f32 %v247, %v225
    %v249 = vmul.f32 %v248, %v247
    %v250 = vmul.f32 0.5, %v249
    %v251 = vsub.f32 1.5, %v250
    %v252 = vmul.f32 %v247, %v251
    %vm253 = vweird.f32 %v225
    %vm254 = vweird.f32 %v247
    %vm255 = vmor %vm253, %vm254
    %v256 = vsel %vm255, %v247, %v252
    %v257 = vrsqrt.pop %v226
    %v258 = vmul.f32 %v257, %v226
    %v259 = vmul.f32 %v258, %v257
    %v260 = vmul.f32 0.5, %v259
    %v261 = vsub.f32 1.5, %v260
    %v262 = vmul.f32 %v257, %v261
    %vm263 = vweird.f32 %v226
    %vm264 = vweird.f32 %v257
    %vm265 = vmor %vm263, %vm264
    %v266 = vsel %vm265, %v257, %v262
    %v267 = vmul.f32 %v71, %v236
    %v268 = vmul.f32 %v72, %v246
    %v269 = vmul.f32 %v73, %v256
    %v270 = vmul.f32 %v74, %v266
    %272 = vset.pattern.permute.xlu0 0
    %273 = vperm.xlu0 %272, %v267
    %v274 = vpop.permute.xlu0 %273
    %277 = vset.pattern.permute.xlu0 0
    %278 = vperm.xlu0 %277, %v268
    %v279 = vpop.permute.xlu0 %278
    %282 = vset.pattern.permute.xlu0 0
    %283 = vperm.xlu0 %282, %v269
    %v284 = vpop.permute.xlu0 %283
    %287 = vset.pattern.permute.xlu0 0
    %288 = vperm.xlu0 %287, %v270
    %v289 = vpop.permute.xlu0 %288
    %v291 = vmul.f32 %v140, %v274
    %v292 = vmul.f32 %v159, %v274
    %v293 = vmul.f32 %v142, %v279
    %v294 = vmul.f32 %v161, %v279
    %v295 = vmul.f32 %v145, %v284
    %v296 = vmul.f32 %v164, %v284
    %v297 = vmul.f32 %v147, %v289
    %v298 = vmul.f32 %v166, %v289
    %v299 = vmul.f32 %v187, %v267
    %v300 = vmul.f32 %v188, %v268
    %v301 = vmul.f32 %v189, %v269
    %v302 = vmul.f32 %v190, %v270
    %307 = vrot.lane.b32.xlu0 %v299, 1
    %v308 = vpop.permute.xlu0 %307
    %309 = vrot.lane.b32.xlu0 %v300, 1
    %v310 = vpop.permute.xlu0 %309
    %311 = vrot.lane.b32.xlu0 %v301, 1
    %v312 = vpop.permute.xlu0 %311
    %313 = vrot.lane.b32.xlu0 %v302, 1
    %v314 = vpop.permute.xlu0 %313
    %v319 = vsub.f32 %v71, %v308
    %v320 = vsub.f32 %v72, %v310
    %v321 = vsub.f32 %v73, %v312
    %v322 = vsub.f32 %v74, %v314
    %324 = vset.pattern.permute.xlu0 1
    %325 = vperm.xlu0 %324, %v319
    %v326 = vpop.permute.xlu0 %325
    %329 = vset.pattern.permute.xlu0 1
    %330 = vperm.xlu0 %329, %v320
    %v331 = vpop.permute.xlu0 %330
    %334 = vset.pattern.permute.xlu0 1
    %335 = vperm.xlu0 %334, %v321
    %v336 = vpop.permute.xlu0 %335
    %339 = vset.pattern.permute.xlu0 1
    %340 = vperm.xlu0 %339, %v322
    %v341 = vpop.permute.xlu0 %340
    %v343 = vadd.f32 %v291, %v326
    %v344 = vadd.f32 %v292, %v326
    %v345 = vadd.f32 %v293, %v331
    %v346 = vadd.f32 %v294, %v331
    %v347 = vadd.f32 %v295, %v336
    %v348 = vadd.f32 %v296, %v336
    %v349 = vadd.f32 %v297, %v341
    %v350 = vadd.f32 %v298, %v341
    %v351 = vmax.f32 %v343, 0.0
    %v352 = vmax.f32 %v344, 0.0
    %v353 = vmax.f32 %v345, 0.0
    %v354 = vmax.f32 %v346, 0.0
    %v355 = vmax.f32 %v347, 0.0
    %v356 = vmax.f32 %v348, 0.0
    %v357 = vmax.f32 %v349, 0.0
    %v358 = vmax.f32 %v350, 0.0
    %359 = vrot.lane.b32.xlu0 %v351, 1
    %v360 = vpop.permute.xlu0 %359
    %361 = vrot.lane.b32.xlu0 %v353, 1
    %v362 = vpop.permute.xlu0 %361
    %363 = vrot.lane.b32.xlu0 %v355, 1
    %v364 = vpop.permute.xlu0 %363
    %365 = vrot.lane.b32.xlu0 %v357, 1
    %v366 = vpop.permute.xlu0 %365
    %367 = vrot.lane.b32.xlu0 %v352, 1
    %v368 = vpop.permute.xlu0 %367
    %369 = vrot.lane.b32.xlu0 %v354, 1
    %v370 = vpop.permute.xlu0 %369
    %371 = vrot.lane.b32.xlu0 %v356, 1
    %v372 = vpop.permute.xlu0 %371
    %373 = vrot.lane.b32.xlu0 %v358, 1
    %v374 = vpop.permute.xlu0 %373
    %v375 = vsel %vm83, %v360, %v368
    %v376 = vsel %vm83, %v362, %v370
    %v377 = vsel %vm83, %v364, %v372
    %v378 = vsel %vm83, %v366, %v374
    %v379 = vsel %vm83, %v368, %v360
    %v380 = vsel %vm83, %v370, %v362
    %v381 = vsel %vm83, %v372, %v364
    %v382 = vsel %vm83, %v374, %v366
    %v383 = vsel %vm90, 0.0, %v379
    %v384 = vsel %vm91, 0.0, %v375
    %v385 = vsel %vm90, 0.0, %v380
    %v386 = vsel %vm91, 0.0, %v376
    %v387 = vsel %vm90, 0.0, %v381
    %v388 = vsel %vm91, 0.0, %v377
    %v389 = vsel %vm90, 0.0, %v382
    %v390 = vsel %vm91, 0.0, %v378
    %391 = vrot.lane.b32.xlu0 %v351, 127
    %v392 = vpop.permute.xlu0 %391
    %393 = vrot.lane.b32.xlu0 %v353, 127
    %v394 = vpop.permute.xlu0 %393
    %395 = vrot.lane.b32.xlu0 %v355, 127
    %v396 = vpop.permute.xlu0 %395
    %397 = vrot.lane.b32.xlu0 %v357, 127
    %v398 = vpop.permute.xlu0 %397
    %399 = vrot.lane.b32.xlu0 %v352, 127
    %v400 = vpop.permute.xlu0 %399
    %401 = vrot.lane.b32.xlu0 %v354, 127
    %v402 = vpop.permute.xlu0 %401
    %403 = vrot.lane.b32.xlu0 %v356, 127
    %v404 = vpop.permute.xlu0 %403
    %405 = vrot.lane.b32.xlu0 %v358, 127
    %v406 = vpop.permute.xlu0 %405
    %v407 = vsel %vm104, %v392, %v400
    %v408 = vsel %vm104, %v394, %v402
    %v409 = vsel %vm104, %v396, %v404
    %v410 = vsel %vm104, %v398, %v406
    %v411 = vsel %vm104, %v400, %v392
    %v412 = vsel %vm104, %v402, %v394
    %v413 = vsel %vm104, %v404, %v396
    %v414 = vsel %vm104, %v406, %v398
    %v415 = vsel %vm111, 0.0, %v407
    %v416 = vsel %vm112, 0.0, %v411
    %v417 = vsel %vm111, 0.0, %v408
    %v418 = vsel %vm112, 0.0, %v412
    %v419 = vsel %vm111, 0.0, %v409
    %v420 = vsel %vm112, 0.0, %v413
    %v421 = vsel %vm111, 0.0, %v410
    %v422 = vsel %vm112, 0.0, %v414
    %v423 = vpack.c.bf16 %v385, %v383
    %v424 = vpack.c.bf16 %v386, %v384
    %v425 = vpack.c.bf16 %v389, %v387
    %v426 = vpack.c.bf16 %v390, %v388
    %v427 = vpack.c.bf16 %v353, %v351
    %v428 = vpack.c.bf16 %v354, %v352
    %v429 = vpack.c.bf16 %v357, %v355
    %v430 = vpack.c.bf16 %v358, %v356
    %v431 = vpack.c.bf16 %v417, %v415
    %v432 = vpack.c.bf16 %v418, %v416
    %v433 = vpack.c.bf16 %v421, %v419
    %v434 = vpack.c.bf16 %v422, %v420
    %vm435 = vcmask 785408
    %v437 = vsel %vm435, %v69, 0
    %v440 = vsel %vm435, %v70, 0
    %442 = vmatpush.bf16.msra.mxu0 0
    %443 = vmatpush.bf16.msra.mxu0 0
    %444 = vmatpush.bf16.msra.mxu0 %v433
    %445 = vmatpush.bf16.msra.mxu0 %v431
    %446 = vmatpush.bf16.msra.mxu0 %v429
    %447 = vmatpush.bf16.msra.mxu0 %v427
    %448 = vmatpush.bf16.msra.mxu0 %v425
    %449 = vmatpush.bf16.msra.mxu0 %v423
    %450 = vmatmul.bf16.gmra.mxu0 %v437
    %v451 = vpop.f32.mrf.mxu0
    %v452 = vadd.f32 0.0, %v451
    %v453 = vpop.f32.mrf.mxu0
    %v454 = vadd.f32 0.0, %v453
    %455 = vmatmul.bf16.gmra.mxu0 %v440
    %v456 = vpop.f32.mrf.mxu0
    %v457 = vadd.f32 0.0, %v456
    %v458 = vpop.f32.mrf.mxu0
    %v459 = vadd.f32 0.0, %v458
    %460 = vdwg.mxu0
    %461 = vmatpush.bf16.msra.mxu0 0
    %462 = vmatpush.bf16.msra.mxu0 0
    %463 = vmatpush.bf16.msra.mxu0 %v434
    %464 = vmatpush.bf16.msra.mxu0 %v432
    %465 = vmatpush.bf16.msra.mxu0 %v430
    %466 = vmatpush.bf16.msra.mxu0 %v428
    %467 = vmatpush.bf16.msra.mxu0 %v426
    %468 = vmatpush.bf16.msra.mxu0 %v424
    %469 = vmatmul.bf16.gmra.mxu0 %v437
    %v470 = vpop.f32.mrf.mxu0
    %v471 = vadd.f32 0.0, %v470
    %v472 = vpop.f32.mrf.mxu0
    %v473 = vadd.f32 0.0, %v472
    %474 = vmatmul.bf16.gmra.mxu0 %v440
    %v475 = vpop.f32.mrf.mxu0
    %v476 = vadd.f32 0.0, %v475
    %v477 = vpop.f32.mrf.mxu0
    %v478 = vadd.f32 0.0, %v477
    %479 = vdwg.mxu0
    %v480 = vadd.f32 %v452, %v471
    %481 = vadd.xlane.f32.xlu0 %v480
    %v482 = vpop.xlane.xlu0 %481
    %v483 = vadd.f32 %v454, %v473
    %484 = vadd.xlane.f32.xlu0 %v483
    %v485 = vpop.xlane.xlu0 %484
    %v486 = vadd.f32 %v457, %v476
    %487 = vadd.xlane.f32.xlu0 %v486
    %v488 = vpop.xlane.xlu0 %487
    %v489 = vadd.f32 %v459, %v478
    %490 = vadd.xlane.f32.xlu0 %v489
    %v491 = vpop.xlane.xlu0 %490
    %v492 = vmul.f32 %v482, %v186
    %v493 = vmul.f32 %v485, %v186
    %v494 = vmul.f32 %v488, %v186
    %v495 = vmul.f32 %v491, %v186
    %v496 = vmul.f32 %v452, %v452
    %v497 = vmul.f32 %v471, %v471
    %v498 = vmul.f32 %v454, %v454
    %v499 = vmul.f32 %v473, %v473
    %v500 = vmul.f32 %v457, %v457
    %v501 = vmul.f32 %v476, %v476
    %v502 = vmul.f32 %v459, %v459
    %v503 = vmul.f32 %v478, %v478
    %v504 = vadd.f32 %v496, %v497
    %505 = vadd.xlane.f32.xlu0 %v504
    %v506 = vpop.xlane.xlu0 %505
    %v507 = vadd.f32 %v498, %v499
    %508 = vadd.xlane.f32.xlu0 %v507
    %v509 = vpop.xlane.xlu0 %508
    %v510 = vadd.f32 %v500, %v501
    %511 = vadd.xlane.f32.xlu0 %v510
    %v512 = vpop.xlane.xlu0 %511
    %v513 = vadd.f32 %v502, %v503
    %514 = vadd.xlane.f32.xlu0 %v513
    %v515 = vpop.xlane.xlu0 %514
    %v516 = vmul.f32 %v506, %v186
    %v517 = vmul.f32 %v509, %v186
    %v518 = vmul.f32 %v512, %v186
    %v519 = vmul.f32 %v515, %v186
    %v520 = vmul.f32 %v492, %v492
    %v521 = vmul.f32 %v493, %v493
    %v522 = vmul.f32 %v494, %v494
    %v523 = vmul.f32 %v495, %v495
    %v524 = vsub.f32 %v516, %v520
    %v525 = vsub.f32 %v517, %v521
    %v526 = vsub.f32 %v518, %v522
    %v527 = vsub.f32 %v519, %v523
    %v528 = vadd.f32 %v524, 1e-05
    %v529 = vadd.f32 %v525, 1e-05
    %v530 = vadd.f32 %v526, 1e-05
    %v531 = vadd.f32 %v527, 1e-05
    %v532 = vrsqrt.pop %v528
    %v533 = vmul.f32 %v532, %v528
    %v534 = vmul.f32 %v533, %v532
    %v535 = vmul.f32 0.5, %v534
    %v536 = vsub.f32 1.5, %v535
    %v537 = vmul.f32 %v532, %v536
    %vm538 = vweird.f32 %v528
    %vm539 = vweird.f32 %v532
    %vm540 = vmor %vm538, %vm539
    %v541 = vsel %vm540, %v532, %v537
    %v542 = vrsqrt.pop %v529
    %v543 = vmul.f32 %v542, %v529
    %v544 = vmul.f32 %v543, %v542
    %v545 = vmul.f32 0.5, %v544
    %v546 = vsub.f32 1.5, %v545
    %v547 = vmul.f32 %v542, %v546
    %vm548 = vweird.f32 %v529
    %vm549 = vweird.f32 %v542
    %vm550 = vmor %vm548, %vm549
    %v551 = vsel %vm550, %v542, %v547
    %v552 = vrsqrt.pop %v530
    %v553 = vmul.f32 %v552, %v530
    %v554 = vmul.f32 %v553, %v552
    %v555 = vmul.f32 0.5, %v554
    %v556 = vsub.f32 1.5, %v555
    %v557 = vmul.f32 %v552, %v556
    %vm558 = vweird.f32 %v530
    %vm559 = vweird.f32 %v552
    %vm560 = vmor %vm558, %vm559
    %v561 = vsel %vm560, %v552, %v557
    %v562 = vrsqrt.pop %v531
    %v563 = vmul.f32 %v562, %v531
    %v564 = vmul.f32 %v563, %v562
    %v565 = vmul.f32 0.5, %v564
    %v566 = vsub.f32 1.5, %v565
    %v567 = vmul.f32 %v562, %v566
    %vm568 = vweird.f32 %v531
    %vm569 = vweird.f32 %v562
    %vm570 = vmor %vm568, %vm569
    %v571 = vsel %vm570, %v562, %v567
    %v572 = vmul.f32 %v71, %v541
    %v573 = vmul.f32 %v72, %v551
    %v574 = vmul.f32 %v73, %v561
    %v575 = vmul.f32 %v74, %v571
    %577 = vset.pattern.permute.xlu0 2
    %578 = vperm.xlu0 %577, %v572
    %v579 = vpop.permute.xlu0 %578
    %582 = vset.pattern.permute.xlu0 2
    %583 = vperm.xlu0 %582, %v573
    %v584 = vpop.permute.xlu0 %583
    %587 = vset.pattern.permute.xlu0 2
    %588 = vperm.xlu0 %587, %v574
    %v589 = vpop.permute.xlu0 %588
    %592 = vset.pattern.permute.xlu0 2
    %593 = vperm.xlu0 %592, %v575
    %v594 = vpop.permute.xlu0 %593
    %v596 = vmul.f32 %v452, %v579
    %v597 = vmul.f32 %v471, %v579
    %v598 = vmul.f32 %v454, %v584
    %v599 = vmul.f32 %v473, %v584
    %v600 = vmul.f32 %v457, %v589
    %v601 = vmul.f32 %v476, %v589
    %v602 = vmul.f32 %v459, %v594
    %v603 = vmul.f32 %v478, %v594
    %v604 = vmul.f32 %v492, %v572
    %v605 = vmul.f32 %v493, %v573
    %v606 = vmul.f32 %v494, %v574
    %v607 = vmul.f32 %v495, %v575
    %612 = vrot.lane.b32.xlu0 %v604, 1
    %v613 = vpop.permute.xlu0 %612
    %614 = vrot.lane.b32.xlu0 %v605, 1
    %v615 = vpop.permute.xlu0 %614
    %616 = vrot.lane.b32.xlu0 %v606, 1
    %v617 = vpop.permute.xlu0 %616
    %618 = vrot.lane.b32.xlu0 %v607, 1
    %v619 = vpop.permute.xlu0 %618
    %v624 = vsub.f32 %v71, %v613
    %v625 = vsub.f32 %v72, %v615
    %v626 = vsub.f32 %v73, %v617
    %v627 = vsub.f32 %v74, %v619
    %629 = vset.pattern.permute.xlu0 3
    %630 = vperm.xlu0 %629, %v624
    %v631 = vpop.permute.xlu0 %630
    %634 = vset.pattern.permute.xlu0 3
    %635 = vperm.xlu0 %634, %v625
    %v636 = vpop.permute.xlu0 %635
    %639 = vset.pattern.permute.xlu0 3
    %640 = vperm.xlu0 %639, %v626
    %v641 = vpop.permute.xlu0 %640
    %644 = vset.pattern.permute.xlu0 3
    %645 = vperm.xlu0 %644, %v627
    %v646 = vpop.permute.xlu0 %645
    %v648 = vadd.f32 %v596, %v631
    %v649 = vadd.f32 %v597, %v631
    %v650 = vadd.f32 %v598, %v636
    %v651 = vadd.f32 %v599, %v636
    %v652 = vadd.f32 %v600, %v641
    %v653 = vadd.f32 %v601, %v641
    %v654 = vadd.f32 %v602, %v646
    %v655 = vadd.f32 %v603, %v646
    %v656 = vmax.f32 %v648, 0.0
    %v657 = vmax.f32 %v650, 0.0
    %v658 = vmax.f32 %v652, 0.0
    %v659 = vmax.f32 %v654, 0.0
    %660 = vst [vmem:[#allocation7] sm:$0xff] %v656
    %661 = vst [vmem:[#allocation7 + $0x8] sm:$0xff] %v657
    %662 = vst [vmem:[#allocation7 + $0x10] sm:$0xff] %v658
    %663 = vst [vmem:[#allocation7 + $0x18] sm:$0xff] %v659
    %v664 = vmax.f32 %v649, 0.0
    %v665 = vmax.f32 %v651, 0.0
    %v666 = vmax.f32 %v653, 0.0
    %v667 = vmax.f32 %v655, 0.0
    %s668 = scalar_lea.vmem [#allocation7], 32
    %669 = vst [vmem:[%s668] sm:$0xff] %v664
    %670 = vst [vmem:[%s668 + $0x8] sm:$0xff] %v665
    %671 = vst [vmem:[%s668 + $0x10] sm:$0xff] %v666
    %672 = vst [vmem:[%s668 + $0x18] sm:$0xff] %v667
    // Predicated region
    $region18: #{tpu_custom_call.1} parent=1 // pred_check
      _
    $region19: #{tpu_custom_call.1} parent=1 // pred_check_branch
      %674 = sbr.rel (0) target = $region21
    $region20: #{tpu_custom_call.1} parent=1 // pred_region
      %676 = vsyncadd [#allocation4], 0
      %s677 = sshll.u32 [#allocation7], 4
      %s678 = int_to_ptr.vmem [resolvable:$true] %s677
      %s679 = sshll.u32 %s2, 4
      %s680 = int_to_ptr.hbm [resolvable:$true] %s679
      %685 = dma.vmem_to_hbm [thread:$0]  %s678, 1024, %s680, [#allocation4], 128, 128, 8
    $region21: #{tpu_custom_call.1} parent=1 // pred_fallthru
      _
    // Predicated region
    $region22: #{tpu_custom_call.1} parent=1 // pred_check
      _
    $region23: #{tpu_custom_call.1} parent=1 // pred_check_branch
      %687 = sbr.rel (0) target = $region25
    $region24: #{tpu_custom_call.1} parent=1 // pred_region
      %689 = dma.done [#allocation4], 1024
    $region25: #{tpu_custom_call.1} parent=1 // pred_fallthru
      _
    %690 = vsyncpa [#allocation3], 1
    %691 = vsyncpa [#allocation6], 1
    %692 = vsyncpa [#allocation4], 1

</llo_original>
